<compile_context>
chip_gen: v6e
topology: v6e:2x2x1
jax: 0.10.0
libtpu: 0.0.40
codegen_flags: <defaults>
</compile_context>

<pallas_src>
import jax
import jax.numpy as jnp
import numpy as np
from jax.experimental import pallas as pl
from jax.experimental.pallas import tpu as pltpu

# ---------------------------------------------------------------------------
# Problem sizes
# ---------------------------------------------------------------------------
N, C, H, W = 2, 4, 16, 16      # image batch, NCHW
NC = N * C                     # 8  (sublane-dense row count of the x slab)
HW = H * W                     # 256
INPUT_DIM = 32                 # feature dim produced by the synthetic `fe`
GRID = 4                       # heads output grid*grid = 16
GG = GRID * GRID
D2 = 2 * INPUT_DIM             # alpha|beta concatenated hidden width (64)
OUT_LANES = 128                # lane-dense packed width (>= 2*GG)
OUT_ROWS = 8                   # sublane-dense packed rows (>= N+1)
BN_EPS = 1e-5
PREC = jax.lax.Precision.HIGHEST


# ---------------------------------------------------------------------------
# Fused Pallas kernel
# ---------------------------------------------------------------------------
def _bn_relu(h, gamma, beta):
    """BatchNorm1d (train-mode batch stats, biased var) + ReLU."""
    mu = jnp.mean(h, axis=0, keepdims=True)
    var = jnp.mean((h - mu) * (h - mu), axis=0, keepdims=True)
    return jnp.maximum((h - mu) * jax.lax.rsqrt(var + BN_EPS) * gamma + beta, 0.0)


def fused_mask_kernel(x_ref,      # (N*C, H*W)   f32  per-step
                      step_ref,   # (8, 128)     f32  per-step:
                                  #   row0 decay*base, row1 0.99*base, row2 (1-decay)
                      sw_ref,     # (16, 128)    f32  weights: rows 0:8 w1(tiled),
                                  #   8 b1, 9 g1, 10 be1, 11 b2, 12 g2, 13 be2, 14 b3
                      w23_ref,    # (256, 128)   bf16: rows 0:128 w2, 128:256 w3
                      out_ref):   # (8, 128)     f32
    # Synthetic fe: global average pool over the H*W lanes (per (n,c) row).
    pooled = jnp.mean(x_ref[...], axis=1, keepdims=True)              # (N*C, 1)

    # Layer 1 (fe projection folded in; alpha|beta concatenated):
    #   h[n,:] = sum_c pooled[n,c] * W1'[c,:]  via broadcast-mul + segment sum.
    t = pooled * sw_ref[0:NC, :]                                       # (N*C, 128)
    h = jnp.concatenate(
        [jnp.sum(t[n * C:(n + 1) * C, :], axis=0, keepdims=True) for n in range(N)],
        axis=0)                                                        # (N, 128)
    h = _bn_relu(h + sw_ref[8:9, :], sw_ref[9:10, :], sw_ref[10:11, :])

    # Layer 2 (block-diagonal alpha|beta, zero-padded to 128 lanes).
    h = jnp.dot(h.astype(jnp.bfloat16), w23_ref[0:OUT_LANES, :],
                preferred_element_type=jnp.float32)
    h = _bn_relu(h + sw_ref[11:12, :], sw_ref[12:13, :], sw_ref[13:14, :])

    # Layer 3: cols 0:GG = alpha(x), GG:2GG = beta(x), rest exact zeros.
    out = jnp.dot(h.astype(jnp.bfloat16), w23_ref[OUT_LANES:2 * OUT_LANES, :],
                  preferred_element_type=jnp.float32) + sw_ref[14:15, :]

    # EMA blending (decay*base and 0.99*base were pre-scaled in the wrapper).
    new_rows = step_ref[0:1, :] + step_ref[2:3, :] * out               # (N, 128)
    ema_row = step_ref[1:2, :] + 0.01 * jnp.mean(out, axis=0, keepdims=True)

    # Single unmasked full-slab store (deterministic zero padding rows).
    pad = jnp.zeros((OUT_ROWS - N - 1, OUT_LANES), jnp.float32)
    out_ref[...] = jnp.concatenate([new_rows, ema_row, pad], axis=0)


# ---------------------------------------------------------------------------
# One-time offline weight packing (hoisted out of the per-step call)
# ---------------------------------------------------------------------------
def pack_weights(params):
    wp, bp = params["wp"], params["bp"]                     # (C, D), (1, D)
    a, b = params["alpha"], params["beta"]

    def fold_l1(p):  # fe projection folded into layer 1 (exact in real arith)
        w1, b1 = p[0], p[1]
        return (jnp.dot(wp, w1, precision=PREC),
                jnp.dot(bp, w1, precision=PREC) + b1)

    def blockdiag(wa, wb):
        top = jnp.concatenate([wa, jnp.zeros((wa.shape[0], wb.shape[1]), wa.dtype)], 1)
        bot = jnp.concatenate([jnp.zeros((wb.shape[0], wa.shape[1]), wb.dtype), wb], 1)
        return jnp.concatenate([top, bot], 0)

    wa1, ba1 = fold_l1(a)
    wb1, bb1 = fold_l1(b)
    w1c = jnp.concatenate([wa1, wb1], 1)                    # (C, D2)
    b1c = jnp.concatenate([ba1, bb1], 1)
    g1c = jnp.concatenate([a[2], b[2]], 1)
    be1c = jnp.concatenate([a[3], b[3]], 1)
    w2c = blockdiag(a[4], b[4])                             # (D2, D2)
    b2c = jnp.concatenate([a[5], b[5]], 1)
    g2c = jnp.concatenate([a[6], b[6]], 1)
    be2c = jnp.concatenate([a[7], b[7]], 1)
    w3c = blockdiag(a[8], b[8])                             # (D2, 2*GG)
    b3c = jnp.concatenate([a[9], b[9]], 1)                  # (1, 2*GG)

    def pad_lanes(v):  # zero-pad lanes to 128 (padded columns stay exactly 0)
        return jnp.pad(v, ((0, 0), (0, OUT_LANES - v.shape[1])))

    # Small f32 slab (16, 128): rows 0:8 = W1' tiled over samples, rows 8..14
    # = [b1, g1, be1, b2, g2, be2, b3], row 15 zeros.
    w1t = jnp.tile(w1c, (N, 1))                             # (N*C, D2)
    smallw = jnp.concatenate(
        [pad_lanes(w1t), pad_lanes(b1c), pad_lanes(g1c), pad_lanes(be1c),
         pad_lanes(b2c), pad_lanes(g2c), pad_lanes(be2c), pad_lanes(b3c),
         jnp.zeros((1, OUT_LANES), jnp.float32)], axis=0).astype(jnp.float32)

    # bf16 slab (256, 128): rows 0:128 = w2 (zero-padded), 128:256 = w3.
    w2full = jnp.zeros((OUT_LANES, OUT_LANES), jnp.float32).at[:D2, :D2].set(w2c)
    w3full = jnp.zeros((OUT_LANES, OUT_LANES), jnp.float32).at[:D2, :2 * GG].set(w3c)
    w23 = jnp.concatenate([w2full, w3full], axis=0).astype(jnp.bfloat16)
    return smallw, w23


# ---------------------------------------------------------------------------
# Forward wrapper (jitted; single pallas_call)
# ---------------------------------------------------------------------------
@jax.jit
def mask_generator_forward(x, base_alpha, base_beta, smallw, w23, decay=0.9):
    x2 = x.reshape(NC, HW)                                            # (8, 256)
    base_packed = jnp.pad(jnp.concatenate([base_alpha, base_beta], axis=1),
                          ((0, 0), (0, OUT_LANES - 2 * GG)))          # (1, 128)
    decay = jnp.asarray(decay, jnp.float32)
    step = jnp.concatenate(
        [decay * base_packed,                                          # row 0
         0.99 * base_packed,                                           # row 1
         jnp.broadcast_to(1.0 - decay, (1, OUT_LANES)).astype(jnp.float32),
         jnp.zeros((OUT_ROWS - 3, OUT_LANES), jnp.float32)], axis=0)   # (8, 128)

    flops = int(2 * N * OUT_LANES * OUT_LANES * 2      # w2 + w3 matmuls
                + 2 * NC * HW + 4 * NC * OUT_LANES)    # pooling + layer 1
    bytes_accessed = int(x2.size * 4 + step.size * 4 + smallw.size * 4
                         + w23.size * 2 + OUT_ROWS * OUT_LANES * 4)

    vmem = pltpu.MemorySpace.VMEM
    packed = pl.pallas_call(
        fused_mask_kernel,
        out_shape=jax.ShapeDtypeStruct((OUT_ROWS, OUT_LANES), jnp.float32),
        in_specs=[pl.BlockSpec(memory_space=vmem)] * 4,
        out_specs=pl.BlockSpec(memory_space=vmem),
        cost_estimate=pl.CostEstimate(flops=flops,
                                      transcendentals=2 * OUT_LANES,
                                      bytes_accessed=bytes_accessed),
    )(x2, step, smallw, w23)

    # Unpack the lane-dense slab (layout plumbing only).
    new_alpha = packed[:N, :GG]
    new_beta = packed[:N, GG:2 * GG]
    base_alpha_new = packed[N:N + 1, :GG]
    base_beta_new = packed[N:N + 1, GG:2 * GG]
    return new_alpha, new_beta, base_alpha_new, base_beta_new


# ---------------------------------------------------------------------------
# Deterministic parameter init (PyTorch-Linear-like uniform scaling)
# ---------------------------------------------------------------------------
def _linear(key, fan_in, fan_out):
    kw, kb = jax.random.split(key)
    bound = 1.0 / jnp.sqrt(fan_in)
    w = jax.random.uniform(kw, (fan_in, fan_out), jnp.float32, -bound, bound)
    b = jax.random.uniform(kb, (1, fan_out), jnp.float32, -bound, bound)
    return w, b


def _head_params(key, d, gg):
    k1, k2, k3 = jax.random.split(key, 3)
    w1, b1 = _linear(k1, d, d)
    w2, b2 = _linear(k2, d, d)
    w3, b3 = _linear(k3, d, gg)
    g1, be1 = jnp.ones((1, d), jnp.float32), jnp.zeros((1, d), jnp.float32)
    g2, be2 = jnp.ones((1, d), jnp.float32), jnp.zeros((1, d), jnp.float32)
    return (w1, b1, g1, be1, w2, b2, g2, be2, w3, b3)


def make_params(key):
    kfe, ka, kb = jax.random.split(key, 3)
    wp, bp = _linear(kfe, C, INPUT_DIM)
    return {"wp": wp, "bp": bp,
            "alpha": _head_params(ka, INPUT_DIM, GG),
            "beta": _head_params(kb, INPUT_DIM, GG)}


# ---------------------------------------------------------------------------
# Pure-JAX reference (original, unfolded/uncombined parameterization)
# ---------------------------------------------------------------------------
def _reference_forward(x, base_alpha, base_beta, params, decay):
    pooled = jnp.mean(x.reshape(N, C, H * W), axis=2)
    feat = jnp.dot(pooled, params["wp"], precision=PREC) + params["bp"]

    def head(p):
        w1, b1, g1, be1, w2, b2, g2, be2, w3, b3 = p

        def bn_relu(h, g, be):
            mu = h.mean(0, keepdims=True)
            var = ((h - mu) ** 2).mean(0, keepdims=True)
            return jnp.maximum((h - mu) * jax.lax.rsqrt(var + BN_EPS) * g + be, 0.0)

        h = bn_relu(jnp.dot(feat, w1, precision=PREC) + b1, g1, be1)
        h = bn_relu(jnp.dot(h, w2, precision=PREC) + b2, g2, be2)
        return jnp.dot(h, w3, precision=PREC) + b3

    oa, ob = head(params["alpha"]), head(params["beta"])
    new_alpha = decay * base_alpha + (1.0 - decay) * oa
    new_beta = decay * base_beta + (1.0 - decay) * ob
    ba = 0.99 * base_alpha + 0.01 * jnp.mean(oa, axis=0, keepdims=True)
    bb = 0.99 * base_beta + 0.01 * jnp.mean(ob, axis=0, keepdims=True)
    return new_alpha, new_beta, ba, bb


# ---------------------------------------------------------------------------
if __name__ == "__main__":
    key = jax.random.PRNGKey(0)
    kx, ka, kb, kp = jax.random.split(key, 4)

    x = jax.random.normal(kx, (N, C, H, W), jnp.float32)          # NCHW
    base_alpha = jax.random.normal(ka, (1, GG), jnp.float32)
    base_beta = jax.random.normal(kb, (1, GG), jnp.float32)
    params = make_params(kp)

    # One-time weight packing, hoisted out of the per-step (jitted) call.
    smallw, w23 = jax.block_until_ready(pack_weights(params))

    outs = jax.block_until_ready(
        mask_generator_forward(x, base_alpha, base_beta, smallw, w23, 0.9))
    new_alpha, new_beta, base_alpha_new, base_beta_new = outs

    assert new_alpha.shape == (N, GG)
    assert new_beta.shape == (N, GG)
    assert base_alpha_new.shape == (1, GG)
    assert base_beta_new.shape == (1, GG)

    refs = _reference_forward(x, base_alpha, base_beta, params, 0.9)
    for got, want in zip(outs, refs):
        np.testing.assert_allclose(np.asarray(got), np.asarray(want),
                                   atol=5e-3, rtol=5e-2)

    print("KERNEL_OK")
</pallas_src>

<mosaic_0001>
module attributes {stable_mosaic.version = 11 : i64} {
  func.func @fused_mask_kernel(%arg0: memref<8x256xf32, #tpu.memory_space<vmem>>, %arg1: memref<8x128xf32, #tpu.memory_space<vmem>>, %arg2: memref<16x128xf32, #tpu.memory_space<vmem>>, %arg3: memref<256x128xbf16, #tpu.memory_space<vmem>>, %arg4: memref<8x128xf32, #tpu.memory_space<vmem>>) attributes {dimension_semantics = [], scalar_prefetch = 0 : i64, scratch_operands = 0 : i64, tpu.core_type = #tpu.core_type<tc>} {
    %c0 = arith.constant 0 : index
    %c0_0 = arith.constant 0 : index
    %0 = vector.load %arg0[%c0, %c0_0] : memref<8x256xf32, #tpu.memory_space<vmem>>, vector<8x256xf32>
    %cst = arith.constant dense<0.000000e+00> : vector<8xf32>
    %1 = vector.multi_reduction <add>, %0, %cst [1] : vector<8x256xf32> to vector<8xf32>
    %2 = vector.shape_cast %1 : vector<8xf32> to vector<8x1xf32>
    %cst_1 = arith.constant 2.560000e+02 : f32
    %3 = vector.broadcast %cst_1 : f32 to vector<8x1xf32>
    %4 = arith.divf %2, %3 : vector<8x1xf32>
    %c0_2 = arith.constant 0 : index
    %c0_3 = arith.constant 0 : index
    %5 = vector.load %arg2[%c0_2, %c0_3] : memref<16x128xf32, #tpu.memory_space<vmem>>, vector<8x128xf32>
    %6 = vector.broadcast %4 : vector<8x1xf32> to vector<8x128xf32>
    %7 = arith.mulf %6, %5 : vector<8x128xf32>
    %8 = vector.extract_strided_slice %7 {offsets = [0, 0], sizes = [4, 128], strides = [1, 1]} : vector<8x128xf32> to vector<4x128xf32>
    %cst_4 = arith.constant dense<0.000000e+00> : vector<128xf32>
    %9 = vector.multi_reduction <add>, %8, %cst_4 [0] : vector<4x128xf32> to vector<128xf32>
    %10 = vector.shape_cast %9 : vector<128xf32> to vector<1x128xf32>
    %11 = vector.extract_strided_slice %7 {offsets = [4, 0], sizes = [4, 128], strides = [1, 1]} : vector<8x128xf32> to vector<4x128xf32>
    %cst_5 = arith.constant dense<0.000000e+00> : vector<128xf32>
    %12 = vector.multi_reduction <add>, %11, %cst_5 [0] : vector<4x128xf32> to vector<128xf32>
    %13 = vector.shape_cast %12 : vector<128xf32> to vector<1x128xf32>
    %14 = tpu.concatenate %10, %13 in 0 : vector<1x128xf32>, vector<1x128xf32> -> vector<2x128xf32>
    %c8 = arith.constant 8 : index
    %c0_6 = arith.constant 0 : index
    %15 = vector.load %arg2[%c8, %c0_6] : memref<16x128xf32, #tpu.memory_space<vmem>>, vector<1x128xf32>
    %16 = vector.broadcast %15 : vector<1x128xf32> to vector<2x128xf32>
    %17 = arith.addf %14, %16 : vector<2x128xf32>
    %c9 = arith.constant 9 : index
    %c0_7 = arith.constant 0 : index
    %18 = vector.load %arg2[%c9, %c0_7] : memref<16x128xf32, #tpu.memory_space<vmem>>, vector<1x128xf32>
    %c10 = arith.constant 10 : index
    %c0_8 = arith.constant 0 : index
    %19 = vector.load %arg2[%c10, %c0_8] : memref<16x128xf32, #tpu.memory_space<vmem>>, vector<1x128xf32>
    %cst_9 = arith.constant dense<0.000000e+00> : vector<128xf32>
    %20 = vector.multi_reduction <add>, %17, %cst_9 [0] : vector<2x128xf32> to vector<128xf32>
    %21 = vector.shape_cast %20 : vector<128xf32> to vector<1x128xf32>
    %cst_10 = arith.constant 2.000000e+00 : f32
    %22 = vector.broadcast %cst_10 : f32 to vector<1x128xf32>
    %23 = arith.divf %21, %22 : vector<1x128xf32>
    %24 = vector.broadcast %23 : vector<1x128xf32> to vector<2x128xf32>
    %25 = arith.subf %17, %24 : vector<2x128xf32>
    %26 = vector.broadcast %23 : vector<1x128xf32> to vector<2x128xf32>
    %27 = arith.subf %17, %26 : vector<2x128xf32>
    %28 = arith.mulf %25, %27 : vector<2x128xf32>
    %cst_11 = arith.constant dense<0.000000e+00> : vector<128xf32>
    %29 = vector.multi_reduction <add>, %28, %cst_11 [0] : vector<2x128xf32> to vector<128xf32>
    %30 = vector.shape_cast %29 : vector<128xf32> to vector<1x128xf32>
    %cst_12 = arith.constant 2.000000e+00 : f32
    %31 = vector.broadcast %cst_12 : f32 to vector<1x128xf32>
    %32 = arith.divf %30, %31 : vector<1x128xf32>
    %33 = vector.broadcast %23 : vector<1x128xf32> to vector<2x128xf32>
    %34 = arith.subf %17, %33 : vector<2x128xf32>
    %cst_13 = arith.constant 9.99999974E-6 : f32
    %35 = vector.broadcast %cst_13 : f32 to vector<1x128xf32>
    %36 = arith.addf %32, %35 : vector<1x128xf32>
    %37 = math.rsqrt %36 : vector<1x128xf32>
    %38 = vector.broadcast %37 : vector<1x128xf32> to vector<2x128xf32>
    %39 = arith.mulf %34, %38 : vector<2x128xf32>
    %40 = vector.broadcast %18 : vector<1x128xf32> to vector<2x128xf32>
    %41 = arith.mulf %39, %40 : vector<2x128xf32>
    %42 = vector.broadcast %19 : vector<1x128xf32> to vector<2x128xf32>
    %43 = arith.addf %41, %42 : vector<2x128xf32>
    %cst_14 = arith.constant 0.000000e+00 : f32
    %44 = vector.broadcast %cst_14 : f32 to vector<2x128xf32>
    %45 = arith.maximumf %43, %44 : vector<2x128xf32>
    %46 = arith.truncf %45 : vector<2x128xf32> to vector<2x128xbf16>
    %c0_15 = arith.constant 0 : index
    %c0_16 = arith.constant 0 : index
    %47 = vector.load %arg3[%c0_15, %c0_16] : memref<256x128xbf16, #tpu.memory_space<vmem>>, vector<128x128xbf16>
    %cst_17 = arith.constant dense<0.000000e+00> : vector<2x128xf32>
    %48 = tpu.matmul %46, %47, %cst_17 {dimension_numbers = #tpu.dot_dimension_numbers<[1], [0], [0], [1], [0, 0, 1, 1], [], []>} : vector<2x128xbf16>, vector<128x128xbf16>, vector<2x128xf32> -> vector<2x128xf32>
    %c11 = arith.constant 11 : index
    %c0_18 = arith.constant 0 : index
    %49 = vector.load %arg2[%c11, %c0_18] : memref<16x128xf32, #tpu.memory_space<vmem>>, vector<1x128xf32>
    %50 = vector.broadcast %49 : vector<1x128xf32> to vector<2x128xf32>
    %51 = arith.addf %48, %50 : vector<2x128xf32>
    %c12 = arith.constant 12 : index
    %c0_19 = arith.constant 0 : index
    %52 = vector.load %arg2[%c12, %c0_19] : memref<16x128xf32, #tpu.memory_space<vmem>>, vector<1x128xf32>
    %c13 = arith.constant 13 : index
    %c0_20 = arith.constant 0 : index
    %53 = vector.load %arg2[%c13, %c0_20] : memref<16x128xf32, #tpu.memory_space<vmem>>, vector<1x128xf32>
    %cst_21 = arith.constant dense<0.000000e+00> : vector<128xf32>
    %54 = vector.multi_reduction <add>, %51, %cst_21 [0] : vector<2x128xf32> to vector<128xf32>
    %55 = vector.shape_cast %54 : vector<128xf32> to vector<1x128xf32>
    %cst_22 = arith.constant 2.000000e+00 : f32
    %56 = vector.broadcast %cst_22 : f32 to vector<1x128xf32>
    %57 = arith.divf %55, %56 : vector<1x128xf32>
    %58 = vector.broadcast %57 : vector<1x128xf32> to vector<2x128xf32>
    %59 = arith.subf %51, %58 : vector<2x128xf32>
    %60 = vector.broadcast %57 : vector<1x128xf32> to vector<2x128xf32>
    %61 = arith.subf %51, %60 : vector<2x128xf32>
    %62 = arith.mulf %59, %61 : vector<2x128xf32>
    %cst_23 = arith.constant dense<0.000000e+00> : vector<128xf32>
    %63 = vector.multi_reduction <add>, %62, %cst_23 [0] : vector<2x128xf32> to vector<128xf32>
    %64 = vector.shape_cast %63 : vector<128xf32> to vector<1x128xf32>
    %cst_24 = arith.constant 2.000000e+00 : f32
    %65 = vector.broadcast %cst_24 : f32 to vector<1x128xf32>
    %66 = arith.divf %64, %65 : vector<1x128xf32>
    %67 = vector.broadcast %57 : vector<1x128xf32> to vector<2x128xf32>
    %68 = arith.subf %51, %67 : vector<2x128xf32>
    %cst_25 = arith.constant 9.99999974E-6 : f32
    %69 = vector.broadcast %cst_25 : f32 to vector<1x128xf32>
    %70 = arith.addf %66, %69 : vector<1x128xf32>
    %71 = math.rsqrt %70 : vector<1x128xf32>
    %72 = vector.broadcast %71 : vector<1x128xf32> to vector<2x128xf32>
    %73 = arith.mulf %68, %72 : vector<2x128xf32>
    %74 = vector.broadcast %52 : vector<1x128xf32> to vector<2x128xf32>
    %75 = arith.mulf %73, %74 : vector<2x128xf32>
    %76 = vector.broadcast %53 : vector<1x128xf32> to vector<2x128xf32>
    %77 = arith.addf %75, %76 : vector<2x128xf32>
    %cst_26 = arith.constant 0.000000e+00 : f32
    %78 = vector.broadcast %cst_26 : f32 to vector<2x128xf32>
    %79 = arith.maximumf %77, %78 : vector<2x128xf32>
    %80 = arith.truncf %79 : vector<2x128xf32> to vector<2x128xbf16>
    %c128 = arith.constant 128 : index
    %c0_27 = arith.constant 0 : index
    %81 = vector.load %arg3[%c128, %c0_27] : memref<256x128xbf16, #tpu.memory_space<vmem>>, vector<128x128xbf16>
    %cst_28 = arith.constant dense<0.000000e+00> : vector<2x128xf32>
    %82 = tpu.matmul %80, %81, %cst_28 {dimension_numbers = #tpu.dot_dimension_numbers<[1], [0], [0], [1], [0, 0, 1, 1], [], []>} : vector<2x128xbf16>, vector<128x128xbf16>, vector<2x128xf32> -> vector<2x128xf32>
    %c14 = arith.constant 14 : index
    %c0_29 = arith.constant 0 : index
    %83 = vector.load %arg2[%c14, %c0_29] : memref<16x128xf32, #tpu.memory_space<vmem>>, vector<1x128xf32>
    %84 = vector.broadcast %83 : vector<1x128xf32> to vector<2x128xf32>
    %85 = arith.addf %82, %84 : vector<2x128xf32>
    %c0_30 = arith.constant 0 : index
    %c0_31 = arith.constant 0 : index
    %86 = vector.load %arg1[%c0_30, %c0_31] : memref<8x128xf32, #tpu.memory_space<vmem>>, vector<1x128xf32>
    %c2 = arith.constant 2 : index
    %c0_32 = arith.constant 0 : index
    %87 = vector.load %arg1[%c2, %c0_32] : memref<8x128xf32, #tpu.memory_space<vmem>>, vector<1x128xf32>
    %88 = vector.broadcast %87 : vector<1x128xf32> to vector<2x128xf32>
    %89 = arith.mulf %88, %85 : vector<2x128xf32>
    %90 = vector.broadcast %86 : vector<1x128xf32> to vector<2x128xf32>
    %91 = arith.addf %90, %89 : vector<2x128xf32>
    %c1 = arith.constant 1 : index
    %c0_33 = arith.constant 0 : index
    %92 = vector.load %arg1[%c1, %c0_33] : memref<8x128xf32, #tpu.memory_space<vmem>>, vector<1x128xf32>
    %cst_34 = arith.constant dense<0.000000e+00> : vector<128xf32>
    %93 = vector.multi_reduction <add>, %85, %cst_34 [0] : vector<2x128xf32> to vector<128xf32>
    %94 = vector.shape_cast %93 : vector<128xf32> to vector<1x128xf32>
    %cst_35 = arith.constant 2.000000e+00 : f32
    %95 = vector.broadcast %cst_35 : f32 to vector<1x128xf32>
    %96 = arith.divf %94, %95 : vector<1x128xf32>
    %cst_36 = arith.constant 0.00999999977 : f32
    %97 = vector.broadcast %cst_36 : f32 to vector<1x128xf32>
    %98 = arith.mulf %97, %96 : vector<1x128xf32>
    %99 = arith.addf %92, %98 : vector<1x128xf32>
    %cst_37 = arith.constant 0.000000e+00 : f32
    %100 = vector.broadcast %cst_37 : f32 to vector<5x128xf32>
    %101 = tpu.concatenate %91, %99, %100 in 0 : vector<2x128xf32>, vector<1x128xf32>, vector<5x128xf32> -> vector<8x128xf32>
    %c0_38 = arith.constant 0 : index
    %c0_39 = arith.constant 0 : index
    %102 = vector.load %arg4[%c0_38, %c0_39] : memref<8x128xf32, #tpu.memory_space<vmem>>, vector<8x128xf32>
    tpu.vector_store %arg4[%c0_38, %c0_39], %101 {strides = array<i32>} : memref<8x128xf32, #tpu.memory_space<vmem>>, vector<8x128xf32>,
    return
  }
}

</mosaic_0001>

<llo_original>
// kernel: mask_generator_forward.1
$region0: #{mask_generator_forward.1}
  #allocation0 [shape = 'u32[]', space=smem, size = 0x4, offset = 0x4, fixed_abs, tag = 'smem constant byte address 0x4 - core index']
  #allocation1 [shape = 'u32[144,128]{1,0:T(1,128)}', space=vmem, size = 0x12000, scoped, tag = 'internal scratch']
  %s0 = inlined_call_operand.vmem [shape: f32[8,256], index: 0, kind: input, shape index: {}]
  %s1 = inlined_call_operand.vmem [shape: f32[8,128], index: 1, kind: input, shape index: {}]
  %s2 = inlined_call_operand.vmem [shape: f32[16,128], index: 2, kind: input, shape index: {}]
  %s3 = inlined_call_operand.vmem [shape: bf16[256,128], index: 3, kind: input, shape index: {}]
  %s4 = inlined_call_operand.vmem [shape: f32[8,128], index: 4, kind: output, shape index: {}]
  %s5 = sld [smem:[#allocation0]]
  $region26: #{mask_generator_forward.1} parent=0
    _
  %s7 = ssub.s32 1, %s5
  %s8 = scalar_select 0, %s7, %s5
  // Predicated region
  $region2: #{mask_generator_forward.1} parent=0 // pred_check
    _
  $region3: #{mask_generator_forward.1} parent=0 // pred_check_branch
    %10 = sbr.rel (0) target = $region5
  $region4: #{mask_generator_forward.1} parent=0 // pred_region
    _
  $region5: #{mask_generator_forward.1} parent=0 // pred_fallthru
    _
  // Predicated region
  $region6: #{mask_generator_forward.1} parent=0 // pred_check
    _
  $region7: #{mask_generator_forward.1} parent=0 // pred_check_branch
    %12 = sbr.rel (0) target = $region9
  $region8: #{mask_generator_forward.1} parent=0 // pred_region
    _
  $region9: #{mask_generator_forward.1} parent=0 // pred_fallthru
    _
  // Predicated region
  $region10: #{mask_generator_forward.1} parent=0 // pred_check
    _
  $region11: #{mask_generator_forward.1} parent=0 // pred_check_branch
    %14 = sbr.rel (0) target = $region13
  $region12: #{mask_generator_forward.1} parent=0 // pred_region
    _
  $region13: #{mask_generator_forward.1} parent=0 // pred_fallthru
    _
  // Predicated region
  $region14: #{mask_generator_forward.1} parent=0 // pred_check
    _
  $region15: #{mask_generator_forward.1} parent=0 // pred_check_branch
    %16 = sbr.rel (0) target = $region17
  $region16: #{mask_generator_forward.1} parent=0 // pred_region
    _
  $region17: #{mask_generator_forward.1} parent=0 // pred_fallthru
    _
  %v18 = vld [vmem:[%s0] sm:$0xff]
  %v19 = vld [vmem:[%s0 + $0x8] sm:$0xff]
  %v20 = vadd.f32 %v18, %v19
  %21 = vadd.xlane.f32.xlu0 %v20
  %v22 = vpop.xlane.xlu0 %21
  %v23 = vrcp.pop 256.0
  %v24 = vmul.f32 %v22, %v23
  %v25 = vld [vmem:[%s2] sm:$0xff]
  %v26 = vmul.f32 %v24, %v25
  %vm27 = vcmask 1043456
  %v28 = vsel %vm27, %v26, 0.0
  %v29 = vrot.slane %v28, 4
  %v30 = vadd.f32 %v28, %v29
  %v31 = vrot.slane %v30, 2
  %v32 = vadd.f32 %v30, %v31
  %v33 = vrot.slane %v32, 1
  %v34 = vadd.f32 %v32, %v33
  %v36 = vrot.slane %v26, 4
  %v38 = vsel %vm27, %v36, 0.0
  %v39 = vrot.slane %v38, 4
  %v40 = vadd.f32 %v38, %v39
  %v41 = vrot.slane %v40, 2
  %v42 = vadd.f32 %v40, %v41
  %v43 = vrot.slane %v42, 1
  %v44 = vadd.f32 %v42, %v43
  %vm45 = vcmask 1040384
  %v46 = vsel %vm45, %v34, %v44
  %v47 = vld [vmem:[%s2 + $0x8] sm:$0x1]
  %v48 = vlaneseq
  %v49 = vshrl.u32 %v48, 7
  %v50 = vsub.s32 0, %v49
  %v51 = vrot.slane %v47, %v50
  %v52 = vadd.f32 %v46, %v51
  %v53 = vld [vmem:[%s2 + $0x9] sm:$0x1]
  %v54 = vld [vmem:[%s2 + $0xa] sm:$0x1]
  %vm55 = vcmask 1041408
  %v56 = vsel %vm55, %v52, 0.0
  %v57 = vrot.slane %v56, 4
  %v58 = vadd.f32 %v56, %v57
  %v59 = vrot.slane %v58, 2
  %v60 = vadd.f32 %v58, %v59
  %v61 = vrot.slane %v60, 1
  %v62 = vadd.f32 %v60, %v61
  %v63 = vrcp.pop 2.0
  %v64 = vmul.f32 %v62, %v63
  %v65 = vsub.f32 %v52, %v64
  %v66 = vmul.f32 %v65, %v65
  %v67 = vsel %vm55, %v66, 0.0
  %v68 = vrot.slane %v67, 4
  %v69 = vadd.f32 %v67, %v68
  %v70 = vrot.slane %v69, 2
  %v71 = vadd.f32 %v69, %v70
  %v72 = vrot.slane %v71, 1
  %v73 = vadd.f32 %v71, %v72
  %v74 = vmul.f32 %v73, %v63
  %v75 = vadd.f32 %v74, 1e-05
  %v76 = vrsqrt.pop %v75
  %v77 = vmul.f32 %v65, %v76
  %v78 = vlaneseq
  %v79 = vshrl.u32 %v78, 7
  %v80 = vsub.s32 0, %v79
  %v81 = vrot.slane %v53, %v80
  %v82 = vmul.f32 %v77, %v81
  %v83 = vlaneseq
  %v84 = vshrl.u32 %v83, 7
  %v85 = vsub.s32 0, %v84
  %v86 = vrot.slane %v54, %v85
  %v87 = vadd.f32 %v82, %v86
  %v88 = vmax.f32 %v87, 0.0
  %v89 = vpack.c.bf16 %v88, %v88
  %v90 = vld [vmem:[%s3] sm:$0xf]
  %v91 = vld [vmem:[%s3 + $0x4] sm:$0xf]
  %v92 = vld [vmem:[%s3 + $0x8] sm:$0xf]
  %v93 = vld [vmem:[%s3 + $0xc] sm:$0xf]
  %v94 = vld [vmem:[%s3 + $0x10] sm:$0xf]
  %v95 = vld [vmem:[%s3 + $0x14] sm:$0xf]
  %v96 = vld [vmem:[%s3 + $0x18] sm:$0xf]
  %v97 = vld [vmem:[%s3 + $0x1c] sm:$0xf]
  %v98 = vld [vmem:[%s3 + $0x20] sm:$0xf]
  %v99 = vld [vmem:[%s3 + $0x24] sm:$0xf]
  %v100 = vld [vmem:[%s3 + $0x28] sm:$0xf]
  %v101 = vld [vmem:[%s3 + $0x2c] sm:$0xf]
  %v102 = vld [vmem:[%s3 + $0x30] sm:$0xf]
  %v103 = vld [vmem:[%s3 + $0x34] sm:$0xf]
  %v104 = vld [vmem:[%s3 + $0x38] sm:$0xf]
  %v105 = vld [vmem:[%s3 + $0x3c] sm:$0xf]
  %v106 = vld [vmem:[%s2 + $0xb] sm:$0x1]
  %v107 = vlaneseq
  %v108 = vshrl.u32 %v107, 7
  %v109 = vsub.s32 0, %v108
  %v110 = vrot.slane %v106, %v109
  %v127 = vunpack.c.l.b16 %v90
  %v128 = vunpack.c.l.b16 %v91
  %v129 = vunpack.c.l.b16 %v92
  %v130 = vunpack.c.l.b16 %v93
  %v131 = vunpack.c.l.b16 %v94
  %v132 = vunpack.c.l.b16 %v95
  %v133 = vunpack.c.l.b16 %v96
  %v134 = vunpack.c.l.b16 %v97
  %v135 = vunpack.c.l.b16 %v98
  %v136 = vunpack.c.l.b16 %v99
  %v137 = vunpack.c.l.b16 %v100
  %v138 = vunpack.c.l.b16 %v101
  %v139 = vunpack.c.l.b16 %v102
  %v140 = vunpack.c.l.b16 %v103
  %v141 = vunpack.c.l.b16 %v104
  %v142 = vunpack.c.l.b16 %v105
  %v143 = vpack.c.b16 %v128, %v127
  %v144 = vpack.c.b16 %v130, %v129
  %v145 = vpack.c.b16 %v132, %v131
  %v146 = vpack.c.b16 %v134, %v133
  %v147 = vpack.c.b16 %v136, %v135
  %v148 = vpack.c.b16 %v138, %v137
  %v149 = vpack.c.b16 %v140, %v139
  %v150 = vpack.c.b16 %v142, %v141
  %159 = vmatprep.subr.bf16.mxu0 0
  %160 = vmatpush1.bf16.msra.mxu0 %v150
  %161 = vmatprep.subr.bf16.mxu0 0
  %162 = vmatpush1.bf16.msra.mxu0 %v149
  %163 = vmatprep.subr.bf16.mxu0 0
  %164 = vmatpush1.bf16.msra.mxu0 %v148
  %165 = vmatprep.subr.bf16.mxu0 0
  %166 = vmatpush1.bf16.msra.mxu0 %v147
  %167 = vmatprep.subr.bf16.mxu0 0
  %168 = vmatpush1.bf16.msra.mxu0 %v146
  %169 = vmatprep.subr.bf16.mxu0 0
  %170 = vmatpush1.bf16.msra.mxu0 %v145
  %171 = vmatprep.subr.bf16.mxu0 0
  %172 = vmatpush1.bf16.msra.mxu0 %v144
  %173 = vmatprep.subr.bf16.mxu0 0
  %174 = vmatpush1.bf16.msra.mxu0 %v143
  %175 = vmatprep.subr.bf16.mxu0 0
  %176 = vmatpush2.bf16.msra.mxu0 0
  %177 = vmatprep.subr.bf16.mxu0 0
  %178 = vmatpush2.bf16.msra.mxu0 0
  %179 = vmatprep.subr.bf16.mxu0 0
  %180 = vmatpush2.bf16.msra.mxu0 0
  %181 = vmatprep.subr.bf16.mxu0 0
  %182 = vmatpush2.bf16.msra.mxu0 0
  %183 = vmatprep.subr.bf16.mxu0 0
  %184 = vmatpush2.bf16.msra.mxu0 0
  %185 = vmatprep.subr.bf16.mxu0 0
  %186 = vmatpush2.bf16.msra.mxu0 0
  %187 = vmatprep.subr.bf16.mxu0 0
  %188 = vmatpush2.bf16.msra.mxu0 0
  %189 = vmatprep.subr.bf16.mxu0 0
  %190 = vmatpush2.bf16.msra.mxu0 0
  %191 = vmatprep.mubr.bf16.mxu0 0
  %192 = vmatmul.mubr.bf16.gmra.mxu0 %v89
  %v193 = vpop.f32.mrf.mxu0
  %v194 = vadd.f32 %v110, %v193
  %v195 = vpop.f32.mrf.mxu0
  %v196 = vpop.f32.mrf.mxu0
  %v197 = vpop.f32.mrf.mxu0
  %198 = vdwg.mxu0
  %v199 = vld [vmem:[%s2 + $0xc] sm:$0x1]
  %v200 = vld [vmem:[%s2 + $0xd] sm:$0x1]
  %v201 = vsel %vm55, %v194, 0.0
  %v202 = vrot.slane %v201, 4
  %v203 = vadd.f32 %v201, %v202
  %v204 = vrot.slane %v203, 2
  %v205 = vadd.f32 %v203, %v204
  %v206 = vrot.slane %v205, 1
  %v207 = vadd.f32 %v205, %v206
  %v208 = vmul.f32 %v207, %v63
  %v209 = vsub.f32 %v194, %v208
  %v210 = vmul.f32 %v209, %v209
  %v211 = vsel %vm55, %v210, 0.0
  %v212 = vrot.slane %v211, 4
  %v213 = vadd.f32 %v211, %v212
  %v214 = vrot.slane %v213, 2
  %v215 = vadd.f32 %v213, %v214
  %v216 = vrot.slane %v215, 1
  %v217 = vadd.f32 %v215, %v216
  %v218 = vmul.f32 %v217, %v63
  %v219 = vadd.f32 %v218, 1e-05
  %v220 = vrsqrt.pop %v219
  %v221 = vmul.f32 %v209, %v220
  %v222 = vlaneseq
  %v223 = vshrl.u32 %v222, 7
  %v224 = vsub.s32 0, %v223
  %v225 = vrot.slane %v199, %v224
  %v226 = vmul.f32 %v221, %v225
  %v227 = vlaneseq
  %v228 = vshrl.u32 %v227, 7
  %v229 = vsub.s32 0, %v228
  %v230 = vrot.slane %v200, %v229
  %v231 = vadd.f32 %v226, %v230
  %v232 = vmax.f32 %v231, 0.0
  %v233 = vpack.c.bf16 %v232, %v232
  %v234 = vld [vmem:[%s3 + $0x40] sm:$0xf]
  %v235 = vld [vmem:[%s3 + $0x44] sm:$0xf]
  %v236 = vld [vmem:[%s3 + $0x48] sm:$0xf]
  %v237 = vld [vmem:[%s3 + $0x4c] sm:$0xf]
  %v238 = vld [vmem:[%s3 + $0x50] sm:$0xf]
  %v239 = vld [vmem:[%s3 + $0x54] sm:$0xf]
  %v240 = vld [vmem:[%s3 + $0x58] sm:$0xf]
  %v241 = vld [vmem:[%s3 + $0x5c] sm:$0xf]
  %v242 = vld [vmem:[%s3 + $0x60] sm:$0xf]
  %v243 = vld [vmem:[%s3 + $0x64] sm:$0xf]
  %v244 = vld [vmem:[%s3 + $0x68] sm:$0xf]
  %v245 = vld [vmem:[%s3 + $0x6c] sm:$0xf]
  %v246 = vld [vmem:[%s3 + $0x70] sm:$0xf]
  %v247 = vld [vmem:[%s3 + $0x74] sm:$0xf]
  %v248 = vld [vmem:[%s3 + $0x78] sm:$0xf]
  %v249 = vld [vmem:[%s3 + $0x7c] sm:$0xf]
  %v250 = vld [vmem:[%s2 + $0xe] sm:$0x1]
  %v251 = vlaneseq
  %v252 = vshrl.u32 %v251, 7
  %v253 = vsub.s32 0, %v252
  %v254 = vrot.slane %v250, %v253
  %v271 = vunpack.c.l.b16 %v234
  %v272 = vunpack.c.l.b16 %v235
  %v273 = vunpack.c.l.b16 %v236
  %v274 = vunpack.c.l.b16 %v237
  %v275 = vunpack.c.l.b16 %v238
  %v276 = vunpack.c.l.b16 %v239
  %v277 = vunpack.c.l.b16 %v240
  %v278 = vunpack.c.l.b16 %v241
  %v279 = vunpack.c.l.b16 %v242
  %v280 = vunpack.c.l.b16 %v243
  %v281 = vunpack.c.l.b16 %v244
  %v282 = vunpack.c.l.b16 %v245
  %v283 = vunpack.c.l.b16 %v246
  %v284 = vunpack.c.l.b16 %v247
  %v285 = vunpack.c.l.b16 %v248
  %v286 = vunpack.c.l.b16 %v249
  %v287 = vpack.c.b16 %v272, %v271
  %v288 = vpack.c.b16 %v274, %v273
  %v289 = vpack.c.b16 %v276, %v275
  %v290 = vpack.c.b16 %v278, %v277
  %v291 = vpack.c.b16 %v280, %v279
  %v292 = vpack.c.b16 %v282, %v281
  %v293 = vpack.c.b16 %v284, %v283
  %v294 = vpack.c.b16 %v286, %v285
  %303 = vmatprep.subr.bf16.mxu0 0
  %304 = vmatpush1.bf16.msra.mxu0 %v294
  %305 = vmatprep.subr.bf16.mxu0 0
  %306 = vmatpush1.bf16.msra.mxu0 %v293
  %307 = vmatprep.subr.bf16.mxu0 0
  %308 = vmatpush1.bf16.msra.mxu0 %v292
  %309 = vmatprep.subr.bf16.mxu0 0
  %310 = vmatpush1.bf16.msra.mxu0 %v291
  %311 = vmatprep.subr.bf16.mxu0 0
  %312 = vmatpush1.bf16.msra.mxu0 %v290
  %313 = vmatprep.subr.bf16.mxu0 0
  %314 = vmatpush1.bf16.msra.mxu0 %v289
  %315 = vmatprep.subr.bf16.mxu0 0
  %316 = vmatpush1.bf16.msra.mxu0 %v288
  %317 = vmatprep.subr.bf16.mxu0 0
  %318 = vmatpush1.bf16.msra.mxu0 %v287
  %319 = vmatprep.subr.bf16.mxu0 0
  %320 = vmatpush2.bf16.msra.mxu0 0
  %321 = vmatprep.subr.bf16.mxu0 0
  %322 = vmatpush2.bf16.msra.mxu0 0
  %323 = vmatprep.subr.bf16.mxu0 0
  %324 = vmatpush2.bf16.msra.mxu0 0
  %325 = vmatprep.subr.bf16.mxu0 0
  %326 = vmatpush2.bf16.msra.mxu0 0
  %327 = vmatprep.subr.bf16.mxu0 0
  %328 = vmatpush2.bf16.msra.mxu0 0
  %329 = vmatprep.subr.bf16.mxu0 0
  %330 = vmatpush2.bf16.msra.mxu0 0
  %331 = vmatprep.subr.bf16.mxu0 0
  %332 = vmatpush2.bf16.msra.mxu0 0
  %333 = vmatprep.subr.bf16.mxu0 0
  %334 = vmatpush2.bf16.msra.mxu0 0
  %335 = vmatprep.mubr.bf16.mxu0 0
  %336 = vmatmul.mubr.bf16.gmra.mxu0 %v233
  %v337 = vpop.f32.mrf.mxu0
  %v338 = vadd.f32 %v254, %v337
  %v339 = vpop.f32.mrf.mxu0
  %v340 = vpop.f32.mrf.mxu0
  %v341 = vpop.f32.mrf.mxu0
  %342 = vdwg.mxu0
  %v343 = vld [vmem:[%s1] sm:$0x1]
  %v344 = vld [vmem:[%s1 + $0x2] sm:$0x1]
  %v345 = vlaneseq
  %v346 = vshrl.u32 %v345, 7
  %v347 = vsub.s32 0, %v346
  %v348 = vrot.slane %v344, %v347
  %v349 = vmul.f32 %v348, %v338
  %v350 = vlaneseq
  %v351 = vshrl.u32 %v350, 7
  %v352 = vsub.s32 0, %v351
  %v353 = vrot.slane %v343, %v352
  %v354 = vadd.f32 %v353, %v349
  %v355 = vld [vmem:[%s1 + $0x1] sm:$0x1]
  %v356 = vsel %vm55, %v338, 0.0
  %v357 = vrot.slane %v356, 4
  %v358 = vadd.f32 %v356, %v357
  %v359 = vrot.slane %v358, 2
  %v360 = vadd.f32 %v358, %v359
  %v361 = vrot.slane %v360, 1
  %v362 = vadd.f32 %v360, %v361
  %v363 = vmul.f32 %v362, %v63
  %v364 = vmul.f32 %v363, 0.01
  %v365 = vadd.f32 %v355, %v364
  %v367 = vrot.slane %v365, 6
  %v369 = vsel %vm55, %v354, %v367
  %vm370 = vcmask 1042432
  %v371 = vsel %vm370, %v369, 0.0
  %372 = vst [vmem:[%s4] sm:$0xff] %v371
  // Predicated region
  $region18: #{mask_generator_forward.1} parent=0 // pred_check
    _
  $region19: #{mask_generator_forward.1} parent=0 // pred_check_branch
    %374 = sbr.rel (0) target = $region21
  $region20: #{mask_generator_forward.1} parent=0 // pred_region
    _
  $region21: #{mask_generator_forward.1} parent=0 // pred_fallthru
    _
  // Predicated region
  $region22: #{mask_generator_forward.1} parent=0 // pred_check
    _
  $region23: #{mask_generator_forward.1} parent=0 // pred_check_branch
    %376 = sbr.rel (0) target = $region25
  $region24: #{mask_generator_forward.1} parent=0 // pred_region
    _
  $region25: #{mask_generator_forward.1} parent=0 // pred_fallthru
    _

</llo_original>
